<compile_context>
chip_gen: v7x
topology: tpu7x:2x2x1
jax: 0.10.0
libtpu: 0.0.40
codegen_flags: <defaults>
</compile_context>

<pallas_src>
import jax
import jax.numpy as jnp
from jax.experimental import pallas as pl
from jax.experimental.pallas import tpu as pltpu

_LANE = 128


def _round_up(x, m):
    return (x + m - 1) // m * m


def _mlp_kernel(x_ref, w1_ref, b1_ref, w2_ref, b2_ref, o_ref, acc_ref):
    k = pl.program_id(1)

    @pl.when(k == 0)
    def _init():
        acc_ref[...] = jnp.zeros_like(acc_ref)

    # First layer slice: (TB, I) @ (I, TH) -> f32, bias + ReLU on the VPU.
    h = jnp.dot(x_ref[...], w1_ref[...], preferred_element_type=jnp.float32)
    h = jnp.maximum(h + b1_ref[...], 0.0)

    # Second layer partial: (TB, TH) @ (TH, O) accumulated in f32 VMEM scratch.
    acc_ref[...] += jnp.dot(h.astype(w2_ref.dtype), w2_ref[...],
                            preferred_element_type=jnp.float32)

    @pl.when(k == pl.num_programs(1) - 1)
    def _finalize():
        o_ref[...] = (acc_ref[...] + b2_ref[...]).astype(o_ref.dtype)


def _bspec(shape, index_map, mode=None):
    if mode is None:
        return pl.BlockSpec(shape, index_map)
    return pl.BlockSpec(shape, index_map, pipeline_mode=mode)


def mlp_pallas(x, w1, b1, w2, b2, *, row_tile=256, hidden_tile=None,
               compute_dtype=jnp.bfloat16):
    """Computes ReLU(x @ w1 + b1) @ w2 + b2 with a fused Pallas TPU kernel.

    x may have arbitrary leading dims; the last dim must equal w1.shape[0].
    """
    in_size, hidden = w1.shape
    hidden2, out_size = w2.shape
    assert hidden == hidden2 and x.shape[-1] == in_size

    lead_shape = x.shape[:-1]
    x2 = x.reshape(-1, in_size).astype(compute_dtype)
    rows = x2.shape[0]
    out_dtype = x.dtype
    itemsize = jnp.dtype(compute_dtype).itemsize

    # Lane-dense feature dims.
    out_p = _round_up(out_size, _LANE)

    # Hidden tile: keep weights fully resident when they fit a budget that is
    # also safe on v7x (64 MiB physical VMEM); otherwise tile the hidden dim
    # and accumulate the second matmul in scratch.
    weight_budget = 20 * 1024 * 1024
    per_hidden_col = (in_size + out_p) * itemsize     # W1 column + W2 row
    if hidden_tile is None:
        th = max(_LANE, (weight_budget // per_hidden_col) // _LANE * _LANE)
        th = min(th, _round_up(hidden, _LANE))
    else:
        th = _round_up(hidden_tile, _LANE)
    hidden_p = _round_up(hidden, th)
    n_h = hidden_p // th

    # Row tile: large enough to feed the MXU, but keep >= 2 grid steps when
    # possible so v7x's two TensorCores both get work. No host-side pad of x.
    tb = row_tile
    if rows < 2 * row_tile:
        tb = min(row_tile, max(8, _round_up(pl.cdiv(rows, 2), 8)))
    n_rows = pl.cdiv(rows, tb)

    # Zero-pad the (cheap) weights / biases; padded hidden columns and padded
    # output columns contribute exactly zero and are sliced off afterwards.
    w1_p = jnp.zeros((in_size, hidden_p), compute_dtype).at[:, :hidden].set(
        w1.astype(compute_dtype))
    b1_p = jnp.zeros((1, hidden_p), jnp.float32).at[0, :hidden].set(
        b1.astype(jnp.float32))
    w2_p = jnp.zeros((hidden_p, out_p), compute_dtype).at[:hidden, :out_size].set(
        w2.astype(compute_dtype))
    b2_p = jnp.zeros((1, out_p), jnp.float32).at[0, :out_size].set(
        b2.astype(jnp.float32))

    # Explicit VMEM budget from the real footprint (+ headroom).
    w_bufs = 1 if n_h == 1 else 2
    footprint = (
        w_bufs * (in_size * th + th * out_p) * itemsize          # W1 / W2 tiles
        + w_bufs * th * 4 + out_p * 4                            # b1 / b2 tiles
        + 2 * tb * in_size * itemsize                            # x tiles
        + 2 * tb * out_p * jnp.dtype(out_dtype).itemsize         # out tiles
        + tb * out_p * 4                                         # f32 accumulator
        + tb * th * 4                                            # h intermediate
    )
    vmem_limit = int(min(max(2 * footprint, 32 * 1024 * 1024), 64 * 1024 * 1024))

    def build(single_buffer_const):
        const_mode = pl.Buffered(1) if single_buffer_const else None
        w_mode = const_mode if n_h == 1 else None
        return pl.pallas_call(
            _mlp_kernel,
            out_shape=jax.ShapeDtypeStruct((rows, out_p), out_dtype),
            grid=(n_rows, n_h),
            in_specs=[
                _bspec((tb, in_size), lambda i, k: (i, 0)),            # x rows
                _bspec((in_size, th), lambda i, k: (0, k), w_mode),    # W1 slice
                _bspec((1, th), lambda i, k: (0, k), w_mode),          # b1 slice
                _bspec((th, out_p), lambda i, k: (k, 0), w_mode),      # W2 slice
                _bspec((1, out_p), lambda i, k: (0, 0), const_mode),   # b2
            ],
            out_specs=pl.BlockSpec((tb, out_p), lambda i, k: (i, 0)),
            scratch_shapes=[pltpu.VMEM((tb, out_p), jnp.float32)],
            compiler_params=pltpu.CompilerParams(
                dimension_semantics=("parallel", "arbitrary"),
                vmem_limit_bytes=vmem_limit),
        )

    try:
        out = build(True)(x2, w1_p, b1_p, w2_p, b2_p)
    except Exception:
        # Fallback if single-buffered pipeline_mode is unsupported in this build.
        out = build(False)(x2, w1_p, b1_p, w2_p, b2_p)

    out = out[:, :out_size]
    return out.reshape(*lead_shape, out_size)


def mlp_reference(x, w1, b1, w2, b2, compute_dtype=jnp.bfloat16):
    """Pure-JAX reference mirroring the kernel's bf16-compute / f32-accumulate."""
    xb = x.astype(compute_dtype)
    h = jnp.dot(xb, w1.astype(compute_dtype), preferred_element_type=jnp.float32)
    h = jnp.maximum(h + b1.astype(jnp.float32), 0.0)
    y = jnp.dot(h.astype(compute_dtype), w2.astype(compute_dtype),
                preferred_element_type=jnp.float32)
    return (y + b2.astype(jnp.float32)).astype(x.dtype)


def _check(out, ref, name):
    if out.shape != ref.shape:
        raise AssertionError(f"{name}: shape {out.shape} != {ref.shape}")
    if not jnp.allclose(out, ref, atol=1e-2, rtol=1e-2):
        raise AssertionError(
            f"{name}: Pallas MLP mismatch vs reference, max abs diff = "
            f"{float(jnp.max(jnp.abs(out - ref)))}")


if __name__ == "__main__":
    key = jax.random.PRNGKey(0)
    keys = jax.random.split(key, 10)

    # Case 1: small shapes consistent with the module (batch=64, 16->32->16).
    batch, in_size, hidden, out_size = 64, 16, 32, 16
    x = jax.random.normal(keys[0], (batch, in_size), jnp.float32)
    w1 = jax.random.normal(keys[1], (in_size, hidden), jnp.float32) / jnp.sqrt(in_size)
    b1 = jax.random.normal(keys[2], (hidden,), jnp.float32) * 0.1
    w2 = jax.random.normal(keys[3], (hidden, out_size), jnp.float32) / jnp.sqrt(hidden)
    b2 = jax.random.normal(keys[4], (out_size,), jnp.float32) * 0.1

    out = jax.block_until_ready(mlp_pallas(x, w1, b1, w2, b2))
    ref = jax.block_until_ready(mlp_reference(x, w1, b1, w2, b2))
    _check(out, ref, "case1")

    # Case 2: ragged batch (overhang row block) + forced hidden-dim tiling
    # (exercises the accumulator / reduction-grid path used for big layers).
    batch2, hidden2 = 37, 300
    xb_ = jax.random.normal(keys[5], (batch2, in_size), jnp.float32)
    w1b = jax.random.normal(keys[6], (in_size, hidden2), jnp.float32) / jnp.sqrt(in_size)
    b1b = jax.random.normal(keys[7], (hidden2,), jnp.float32) * 0.1
    w2b = jax.random.normal(keys[8], (hidden2, out_size), jnp.float32) / jnp.sqrt(hidden2)
    b2b = jax.random.normal(keys[9], (out_size,), jnp.float32) * 0.1

    out2 = jax.block_until_ready(
        mlp_pallas(xb_, w1b, b1b, w2b, b2b, hidden_tile=128))
    ref2 = jax.block_until_ready(mlp_reference(xb_, w1b, b1b, w2b, b2b))
    _check(out2, ref2, "case2")

    print("KERNEL_OK")
</pallas_src>

<mosaic_0001>
module attributes {stable_mosaic.version = 11 : i64} {
  func.func @_mlp_kernel(%arg0: i32, %arg1: i32, %arg2: memref<32x16xbf16, #tpu.memory_space<vmem>>, %arg3: memref<16x128xbf16, #tpu.memory_space<vmem>>, %arg4: memref<1x128xf32, #tpu.memory_space<vmem>>, %arg5: memref<128x128xbf16, #tpu.memory_space<vmem>>, %arg6: memref<1x128xf32, #tpu.memory_space<vmem>>, %arg7: memref<32x128xf32, #tpu.memory_space<vmem>>, %arg8: memref<32x128xf32, #tpu.memory_space<vmem>>) attributes {dimension_semantics = [#tpu.dimension_semantics<parallel>, #tpu.dimension_semantics<arbitrary>], iteration_bounds = array<i64: 2, 1>, scalar_prefetch = 0 : i64, scratch_operands = 1 : i64, tpu.core_type = #tpu.core_type<tc>, window_params = [{transform_indices = @transform_0, window_bounds = array<i64: 32, 16>}, {pipeline_mode = #tpu.pipeline_mode<synchronous>, transform_indices = @transform_1, window_bounds = array<i64: 16, 128>}, {pipeline_mode = #tpu.pipeline_mode<synchronous>, transform_indices = @transform_2, window_bounds = array<i64: 1, 128>}, {pipeline_mode = #tpu.pipeline_mode<synchronous>, transform_indices = @transform_3, window_bounds = array<i64: 128, 128>}, {pipeline_mode = #tpu.pipeline_mode<synchronous>, transform_indices = @transform_4, window_bounds = array<i64: 1, 128>}, {transform_indices = @transform_5, window_bounds = array<i64: 32, 128>}]} {
    %c0_i32 = arith.constant 0 : i32
    %0 = arith.cmpi eq, %arg1, %c0_i32 : i32
    %1 = arith.extui %0 : i1 to i32
    %c0_i32_0 = arith.constant 0 : i32
    %2 = arith.cmpi ne, %1, %c0_i32_0 : i32
    scf.if %2 {
      %cst_16 = arith.constant 0.000000e+00 : f32
      %20 = vector.broadcast %cst_16 : f32 to vector<32x128xf32>
      %c0_17 = arith.constant 0 : index
      %c0_18 = arith.constant 0 : index
      %21 = vector.load %arg8[%c0_17, %c0_18] : memref<32x128xf32, #tpu.memory_space<vmem>>, vector<32x128xf32>
      tpu.vector_store %arg8[%c0_17, %c0_18], %20 {strides = array<i32>} : memref<32x128xf32, #tpu.memory_space<vmem>>, vector<32x128xf32>,
    } else {
    }
    %c0 = arith.constant 0 : index
    %c0_1 = arith.constant 0 : index
    %3 = vector.load %arg2[%c0, %c0_1] : memref<32x16xbf16, #tpu.memory_space<vmem>>, vector<32x16xbf16>
    %c0_2 = arith.constant 0 : index
    %c0_3 = arith.constant 0 : index
    %4 = vector.load %arg3[%c0_2, %c0_3] : memref<16x128xbf16, #tpu.memory_space<vmem>>, vector<16x128xbf16>
    %cst = arith.constant dense<0.000000e+00> : vector<32x128xf32>
    %5 = tpu.matmul %3, %4, %cst {dimension_numbers = #tpu.dot_dimension_numbers<[1], [0], [0], [1], [0, 0, 1, 1], [], []>} : vector<32x16xbf16>, vector<16x128xbf16>, vector<32x128xf32> -> vector<32x128xf32>
    %c0_4 = arith.constant 0 : index
    %c0_5 = arith.constant 0 : index
    %6 = vector.load %arg4[%c0_4, %c0_5] : memref<1x128xf32, #tpu.memory_space<vmem>>, vector<1x128xf32>
    %7 = vector.broadcast %6 : vector<1x128xf32> to vector<32x128xf32>
    %8 = arith.addf %5, %7 : vector<32x128xf32>
    %cst_6 = arith.constant 0.000000e+00 : f32
    %9 = vector.broadcast %cst_6 : f32 to vector<32x128xf32>
    %10 = arith.maximumf %8, %9 : vector<32x128xf32>
    %c0_7 = arith.constant 0 : index
    %c0_8 = arith.constant 0 : index
    %11 = vector.load %arg8[%c0_7, %c0_8] : memref<32x128xf32, #tpu.memory_space<vmem>>, vector<32x128xf32>
    %12 = arith.truncf %10 : vector<32x128xf32> to vector<32x128xbf16>
    %c0_9 = arith.constant 0 : index
    %c0_10 = arith.constant 0 : index
    %13 = vector.load %arg5[%c0_9, %c0_10] : memref<128x128xbf16, #tpu.memory_space<vmem>>, vector<128x128xbf16>
    %cst_11 = arith.constant dense<0.000000e+00> : vector<32x128xf32>
    %14 = tpu.matmul %12, %13, %cst_11 {dimension_numbers = #tpu.dot_dimension_numbers<[1], [0], [0], [1], [0, 0, 1, 1], [], []>} : vector<32x128xbf16>, vector<128x128xbf16>, vector<32x128xf32> -> vector<32x128xf32>
    %15 = arith.addf %11, %14 : vector<32x128xf32>
    %c0_12 = arith.constant 0 : index
    %c0_13 = arith.constant 0 : index
    %16 = vector.load %arg8[%c0_12, %c0_13] : memref<32x128xf32, #tpu.memory_space<vmem>>, vector<32x128xf32>
    tpu.vector_store %arg8[%c0_12, %c0_13], %15 {strides = array<i32>} : memref<32x128xf32, #tpu.memory_space<vmem>>, vector<32x128xf32>,
    %c0_i32_14 = arith.constant 0 : i32
    %17 = arith.cmpi eq, %arg1, %c0_i32_14 : i32
    %18 = arith.extui %17 : i1 to i32
    %c0_i32_15 = arith.constant 0 : i32
    %19 = arith.cmpi ne, %18, %c0_i32_15 : i32
    scf.if %19 {
      %c0_16 = arith.constant 0 : index
      %c0_17 = arith.constant 0 : index
      %20 = vector.load %arg8[%c0_16, %c0_17] : memref<32x128xf32, #tpu.memory_space<vmem>>, vector<32x128xf32>
      %c0_18 = arith.constant 0 : index
      %c0_19 = arith.constant 0 : index
      %21 = vector.load %arg6[%c0_18, %c0_19] : memref<1x128xf32, #tpu.memory_space<vmem>>, vector<1x128xf32>
      %22 = vector.broadcast %21 : vector<1x128xf32> to vector<32x128xf32>
      %23 = arith.addf %20, %22 : vector<32x128xf32>
      %c0_20 = arith.constant 0 : index
      %c0_21 = arith.constant 0 : index
      %24 = vector.load %arg7[%c0_20, %c0_21] : memref<32x128xf32, #tpu.memory_space<vmem>>, vector<32x128xf32>
      tpu.vector_store %arg7[%c0_20, %c0_21], %23 {strides = array<i32>} : memref<32x128xf32, #tpu.memory_space<vmem>>, vector<32x128xf32>,
    } else {
    }
    return
  }
  func.func @transform_0(%arg0: i32, %arg1: i32) -> (i32, i32) {
    %c0_i32 = arith.constant 0 : i32
    %c0_i32_0 = arith.constant 0 : i32
    return %arg0, %c0_i32 : i32, i32
  }
  func.func @transform_1(%arg0: i32, %arg1: i32) -> (i32, i32) {
    %c0_i32 = arith.constant 0 : i32
    %c0_i32_0 = arith.constant 0 : i32
    return %c0_i32, %arg1 : i32, i32
  }
  func.func @transform_2(%arg0: i32, %arg1: i32) -> (i32, i32) {
    %c0_i32 = arith.constant 0 : i32
    %c0_i32_0 = arith.constant 0 : i32
    return %c0_i32, %arg1 : i32, i32
  }
  func.func @transform_3(%arg0: i32, %arg1: i32) -> (i32, i32) {
    %c0_i32 = arith.constant 0 : i32
    %c0_i32_0 = arith.constant 0 : i32
    return %arg1, %c0_i32 : i32, i32
  }
  func.func @transform_4(%arg0: i32, %arg1: i32) -> (i32, i32) {
    %c0_i32 = arith.constant 0 : i32
    %c0_i32_0 = arith.constant 0 : i32
    %c0_i32_1 = arith.constant 0 : i32
    return %c0_i32, %c0_i32_0 : i32, i32
  }
  func.func @transform_5(%arg0: i32, %arg1: i32) -> (i32, i32) {
    %c0_i32 = arith.constant 0 : i32
    %c0_i32_0 = arith.constant 0 : i32
    return %arg0, %c0_i32 : i32, i32
  }
}

module attributes {stable_mosaic.version = 11 : i64} {
  func.func @_mlp_kernel(%arg0: i32, %arg1: i32, %arg2: memref<32x16xbf16, #tpu.memory_space<vmem>>, %arg3: memref<16x128xbf16, #tpu.memory_space<vmem>>, %arg4: memref<1x128xf32, #tpu.memory_space<vmem>>, %arg5: memref<128x128xbf16, #tpu.memory_space<vmem>>, %arg6: memref<1x128xf32, #tpu.memory_space<vmem>>, %arg7: memref<32x128xf32, #tpu.memory_space<vmem>>, %arg8: memref<32x128xf32, #tpu.memory_space<vmem>>) attributes {dimension_semantics = [#tpu.dimension_semantics<parallel>, #tpu.dimension_semantics<arbitrary>], iteration_bounds = array<i64: 2, 1>, scalar_prefetch = 0 : i64, scratch_operands = 1 : i64, tpu.core_type = #tpu.core_type<tc>, window_params = [{transform_indices = @transform_0, window_bounds = array<i64: 32, 16>}, {transform_indices = @transform_1, window_bounds = array<i64: 16, 128>}, {transform_indices = @transform_2, window_bounds = array<i64: 1, 128>}, {transform_indices = @transform_3, window_bounds = array<i64: 128, 128>}, {pipeline_mode = #tpu.pipeline_mode<synchronous>, transform_indices = @transform_4, window_bounds = array<i64: 1, 128>}, {transform_indices = @transform_5, window_bounds = array<i64: 32, 128>}]} {
    %c0_i32 = arith.constant 0 : i32
    %0 = arith.cmpi eq, %arg1, %c0_i32 : i32
    %1 = arith.extui %0 : i1 to i32
    %c0_i32_0 = arith.constant 0 : i32
    %2 = arith.cmpi ne, %1, %c0_i32_0 : i32
    scf.if %2 {
      %cst_16 = arith.constant 0.000000e+00 : f32
      %20 = vector.broadcast %cst_16 : f32 to vector<32x128xf32>
      %c0_17 = arith.constant 0 : index
      %c0_18 = arith.constant 0 : index
      %21 = vector.load %arg8[%c0_17, %c0_18] : memref<32x128xf32, #tpu.memory_space<vmem>>, vector<32x128xf32>
      tpu.vector_store %arg8[%c0_17, %c0_18], %20 {strides = array<i32>} : memref<32x128xf32, #tpu.memory_space<vmem>>, vector<32x128xf32>,
    } else {
    }
    %c0 = arith.constant 0 : index
    %c0_1 = arith.constant 0 : index
    %3 = vector.load %arg2[%c0, %c0_1] : memref<32x16xbf16, #tpu.memory_space<vmem>>, vector<32x16xbf16>
    %c0_2 = arith.constant 0 : index
    %c0_3 = arith.constant 0 : index
    %4 = vector.load %arg3[%c0_2, %c0_3] : memref<16x128xbf16, #tpu.memory_space<vmem>>, vector<16x128xbf16>
    %cst = arith.constant dense<0.000000e+00> : vector<32x128xf32>
    %5 = tpu.matmul %3, %4, %cst {dimension_numbers = #tpu.dot_dimension_numbers<[1], [0], [0], [1], [0, 0, 1, 1], [], []>} : vector<32x16xbf16>, vector<16x128xbf16>, vector<32x128xf32> -> vector<32x128xf32>
    %c0_4 = arith.constant 0 : index
    %c0_5 = arith.constant 0 : index
    %6 = vector.load %arg4[%c0_4, %c0_5] : memref<1x128xf32, #tpu.memory_space<vmem>>, vector<1x128xf32>
    %7 = vector.broadcast %6 : vector<1x128xf32> to vector<32x128xf32>
    %8 = arith.addf %5, %7 : vector<32x128xf32>
    %cst_6 = arith.constant 0.000000e+00 : f32
    %9 = vector.broadcast %cst_6 : f32 to vector<32x128xf32>
    %10 = arith.maximumf %8, %9 : vector<32x128xf32>
    %c0_7 = arith.constant 0 : index
    %c0_8 = arith.constant 0 : index
    %11 = vector.load %arg8[%c0_7, %c0_8] : memref<32x128xf32, #tpu.memory_space<vmem>>, vector<32x128xf32>
    %12 = arith.truncf %10 : vector<32x128xf32> to vector<32x128xbf16>
    %c0_9 = arith.constant 0 : index
    %c0_10 = arith.constant 0 : index
    %13 = vector.load %arg5[%c0_9, %c0_10] : memref<128x128xbf16, #tpu.memory_space<vmem>>, vector<128x128xbf16>
    %cst_11 = arith.constant dense<0.000000e+00> : vector<32x128xf32>
    %14 = tpu.matmul %12, %13, %cst_11 {dimension_numbers = #tpu.dot_dimension_numbers<[1], [0], [0], [1], [0, 0, 1, 1], [], []>} : vector<32x128xbf16>, vector<128x128xbf16>, vector<32x128xf32> -> vector<32x128xf32>
    %15 = arith.addf %11, %14 : vector<32x128xf32>
    %c0_12 = arith.constant 0 : index
    %c0_13 = arith.constant 0 : index
    %16 = vector.load %arg8[%c0_12, %c0_13] : memref<32x128xf32, #tpu.memory_space<vmem>>, vector<32x128xf32>
    tpu.vector_store %arg8[%c0_12, %c0_13], %15 {strides = array<i32>} : memref<32x128xf32, #tpu.memory_space<vmem>>, vector<32x128xf32>,
    %c0_i32_14 = arith.constant 0 : i32
    %17 = arith.cmpi eq, %arg1, %c0_i32_14 : i32
    %18 = arith.extui %17 : i1 to i32
    %c0_i32_15 = arith.constant 0 : i32
    %19 = arith.cmpi ne, %18, %c0_i32_15 : i32
    scf.if %19 {
      %c0_16 = arith.constant 0 : index
      %c0_17 = arith.constant 0 : index
      %20 = vector.load %arg8[%c0_16, %c0_17] : memref<32x128xf32, #tpu.memory_space<vmem>>, vector<32x128xf32>
      %c0_18 = arith.constant 0 : index
      %c0_19 = arith.constant 0 : index
      %21 = vector.load %arg6[%c0_18, %c0_19] : memref<1x128xf32, #tpu.memory_space<vmem>>, vector<1x128xf32>
      %22 = vector.broadcast %21 : vector<1x128xf32> to vector<32x128xf32>
      %23 = arith.addf %20, %22 : vector<32x128xf32>
      %c0_20 = arith.constant 0 : index
      %c0_21 = arith.constant 0 : index
      %24 = vector.load %arg7[%c0_20, %c0_21] : memref<32x128xf32, #tpu.memory_space<vmem>>, vector<32x128xf32>
      tpu.vector_store %arg7[%c0_20, %c0_21], %23 {strides = array<i32>} : memref<32x128xf32, #tpu.memory_space<vmem>>, vector<32x128xf32>,
    } else {
    }
    return
  }
  func.func @transform_0(%arg0: i32, %arg1: i32) -> (i32, i32) {
    %c0_i32 = arith.constant 0 : i32
    %c0_i32_0 = arith.constant 0 : i32
    return %arg0, %c0_i32 : i32, i32
  }
  func.func @transform_1(%arg0: i32, %arg1: i32) -> (i32, i32) {
    %c0_i32 = arith.constant 0 : i32
    %c0_i32_0 = arith.constant 0 : i32
    return %c0_i32, %arg1 : i32, i32
  }
  func.func @transform_2(%arg0: i32, %arg1: i32) -> (i32, i32) {
    %c0_i32 = arith.constant 0 : i32
    %c0_i32_0 = arith.constant 0 : i32
    return %c0_i32, %arg1 : i32, i32
  }
  func.func @transform_3(%arg0: i32, %arg1: i32) -> (i32, i32) {
    %c0_i32 = arith.constant 0 : i32
    %c0_i32_0 = arith.constant 0 : i32
    return %arg1, %c0_i32 : i32, i32
  }
  func.func @transform_4(%arg0: i32, %arg1: i32) -> (i32, i32) {
    %c0_i32 = arith.constant 0 : i32
    %c0_i32_0 = arith.constant 0 : i32
    %c0_i32_1 = arith.constant 0 : i32
    return %c0_i32, %c0_i32_0 : i32, i32
  }
  func.func @transform_5(%arg0: i32, %arg1: i32) -> (i32, i32) {
    %c0_i32 = arith.constant 0 : i32
    %c0_i32_0 = arith.constant 0 : i32
    return %arg0, %c0_i32 : i32, i32
  }
}

</mosaic_0001>

<llo_original>
// kernel: tpu_custom_call.1
$region0: #{tpu_custom_call.1}
  #allocation0 [shape = 'u32[]', space=smem, size = 0x4, offset = 0x4, fixed_abs, tag = 'smem constant byte address 0x4 - core index']
  #allocation1 [shape = 'u32[144,128]{1,0:T(1,128)}', space=vmem, size = 0x12000, scoped, tag = 'internal scratch']
  #allocation2 [shape = 'f32[32,128]{1,0:T(8,128)}', space=vmem, size = 0x4000, scoped, tag = 'scratch operand']
  %s0 = inlined_call_operand.vmem [shape: bf16[64,16], index: 0, kind: input, shape index: {}]
  %s1 = inlined_call_operand.vmem [shape: bf16[16,128], index: 1, kind: input, shape index: {}]
  %s2 = inlined_call_operand.vmem [shape: f32[1,128], index: 2, kind: input, shape index: {}]
  %s3 = inlined_call_operand.hbm [shape: bf16[128,128], index: 3, kind: input, shape index: {}]
  %s4 = inlined_call_operand.vmem [shape: f32[1,128], index: 4, kind: input, shape index: {}]
  %s5 = inlined_call_operand.hbm [shape: f32[64,128], index: 5, kind: output, shape index: {}]
  %s6 = sld [smem:[#allocation0]]
  $region65: #{tpu_custom_call.1} parent=0
    _
  %s8 = ssub.s32 1, %s6
  %s9 = scalar_select 0, %s8, %s6
  $region1: #{tpu_custom_call.1} parent=0
    #allocation3 [shape = 'u8[32768]{0}', space=vmem, size = 0x8000, scoped, tag = 'input window, operand 3, single buffered']
    #allocation4 [shape = 's32[2]{0}', space=sflag, size = 0x8, scoped, tag = 'scoped memory for tpu_custom_call.1']
    #allocation5 [shape = 's32[2]{0}', space=sflag, size = 0x8, scoped, tag = 'scoped memory for tpu_custom_call.1']
    #allocation6 [shape = 'u8[32768]{0}', space=vmem, size = 0x8000, scoped, tag = 'output window, operand 0']
    %10 = vsyncpa [#allocation4], 0
    %11 = vsyncpa [#allocation5], 0
    %s12 = scalar_lea.sflag [#allocation5], 1
    %13 = vsyncpa %s12, 0
    loop: start=0, step=1, limit=4
    $region2: #{tpu_custom_call.1} parent=1 // loop_pre_header
      _
    $region3: #{tpu_custom_call.1} parent=1 // loop_header
      %s15 = sphi 0, %s19
      %p16 = scmp.ge.s32.totalorder %s15, 4
      %s22 = sphi 0, %s34
      %s23 = sphi 0, %s30
      %s24 = sphi 0, %s22
      %s25 = sphi 0, %s23
      %s26 = sphi 0, %s24
      %s27 = sphi 0, %s25
      %s37 = sphi 0, %s39
      %s40 = sphi 0, %s37
      %s41 = sphi 0, %s40
      %s57 = sphi 0, %s41
      %s63 = sphi 0, %s65
      %s66 = sphi 0, %s63
      %s67 = sphi 0, %s66
      %s83 = sphi 0, %s67
      %s89 = sphi 0, %s91
      %s92 = sphi 0, %s89
      %s93 = sphi 0, %s92
      %s109 = sphi 0, %s93
      %s115 = sphi 0, %s117
      %s118 = sphi 0, %s115
      %s119 = sphi 0, %s118
      %s135 = sphi 0, %s119
      %s139 = sphi 0, %s139
      %s141 = sphi 0, %s139
      %s142 = sphi 0, %s141
      %s156 = sphi 0, %s142
      %s162 = sphi 0, %s164
      %s165 = sphi 0, %s162
      %s166 = sphi 0, %s165
      %s182 = sphi 0, %s166
    $region4: #{tpu_custom_call.1} parent=1 // loop_header_branch
      %18 = sbr.rel (%p16) target = $region8
    $region5: #{tpu_custom_call.1} parent=1 // loop_body
      %s20 = ssub.s32 %s15, 1
      %s21 = ssub.s32 %s15, 2
      %s28 = sadd.s32 1, %s23
      %p29 = scmp.ge.s32.totalorder %s28, 1
      %s30 = scalar_select %p29, 0, %s28
      %s31 = sadd.s32 1, %s22
      %s32 = scalar_select %p29, %s31, %s22
      %p33 = scmp.ge.s32.totalorder %s32, 2
      %s34 = scalar_select %p33, 0, %s32
      %s35 = ssub.s32 %s22, %s34
      %p36 = scmp.eq.s32.totalorder %s35, 0
      %s38 = sadd.s32 %s37, 1
      %s39 = scalar_select %p36, %s37, %s38
      %p42 = pneg %p36
      %p43 = scmp.eq.s32.totalorder %s15, 1
      %p44 = por %p42, %p43
      %p45 = scmp.ne.s32.totalorder %s37, %s40
      %p46 = scmp.eq.s32.totalorder %s15, 0
      %p47 = por %p45, %p46
      %p48 = scmp.ne.s32.totalorder %s37, %s40
      %p49 = scmp.eq.s32.totalorder %s20, 1
      %p50 = por %p48, %p49
      %p51 = scmp.ne.s32.totalorder %s40, %s41
      %p52 = scmp.eq.s32.totalorder %s20, 0
      %p53 = por %p51, %p52
      %p54 = scmp.ne.s32.totalorder %s40, %s41
      %p55 = scmp.eq.s32.totalorder %s21, 1
      %p56 = por %p54, %p55
      %p58 = scmp.ne.s32.totalorder %s41, %s57
      %p59 = scmp.eq.s32.totalorder %s21, 0
      %p60 = por %p58, %p59
      %s61 = ssub.s32 %s23, %s30
      %p62 = scmp.eq.s32.totalorder %s61, 0
      %s64 = sadd.s32 %s63, 1
      %s65 = scalar_select %p62, %s63, %s64
      %p68 = pneg %p62
      %p69 = scmp.eq.s32.totalorder %s15, 1
      %p70 = por %p68, %p69
      %p71 = scmp.ne.s32.totalorder %s63, %s66
      %p72 = scmp.eq.s32.totalorder %s15, 0
      %p73 = por %p71, %p72
      %p74 = scmp.ne.s32.totalorder %s63, %s66
      %p75 = scmp.eq.s32.totalorder %s20, 1
      %p76 = por %p74, %p75
      %p77 = scmp.ne.s32.totalorder %s66, %s67
      %p78 = scmp.eq.s32.totalorder %s20, 0
      %p79 = por %p77, %p78
      %p80 = scmp.ne.s32.totalorder %s66, %s67
      %p81 = scmp.eq.s32.totalorder %s21, 1
      %p82 = por %p80, %p81
      %p84 = scmp.ne.s32.totalorder %s67, %s83
      %p85 = scmp.eq.s32.totalorder %s21, 0
      %p86 = por %p84, %p85
      %s87 = ssub.s32 %s23, %s30
      %p88 = scmp.eq.s32.totalorder %s87, 0
      %s90 = sadd.s32 %s89, 1
      %s91 = scalar_select %p88, %s89, %s90
      %p94 = pneg %p88
      %p95 = scmp.eq.s32.totalorder %s15, 1
      %p96 = por %p94, %p95
      %p97 = scmp.ne.s32.totalorder %s89, %s92
      %p98 = scmp.eq.s32.totalorder %s15, 0
      %p99 = por %p97, %p98
      %p100 = scmp.ne.s32.totalorder %s89, %s92
      %p101 = scmp.eq.s32.totalorder %s20, 1
      %p102 = por %p100, %p101
      %p103 = scmp.ne.s32.totalorder %s92, %s93
      %p104 = scmp.eq.s32.totalorder %s20, 0
      %p105 = por %p103, %p104
      %p106 = scmp.ne.s32.totalorder %s92, %s93
      %p107 = scmp.eq.s32.totalorder %s21, 1
      %p108 = por %p106, %p107
      %p110 = scmp.ne.s32.totalorder %s93, %s109
      %p111 = scmp.eq.s32.totalorder %s21, 0
      %p112 = por %p110, %p111
      %s113 = ssub.s32 %s23, %s30
      %p114 = scmp.eq.s32.totalorder %s113, 0
      %s116 = sadd.s32 %s115, 1
      %s117 = scalar_select %p114, %s115, %s116
      %p120 = pneg %p114
      %p121 = scmp.eq.s32.totalorder %s15, 1
      %p122 = por %p120, %p121
      %p123 = scmp.ne.s32.totalorder %s115, %s118
      %p124 = scmp.eq.s32.totalorder %s15, 0
      %p125 = por %p123, %p124
      %p126 = scmp.ne.s32.totalorder %s115, %s118
      %p127 = scmp.eq.s32.totalorder %s20, 1
      %p128 = por %p126, %p127
      %p129 = scmp.ne.s32.totalorder %s118, %s119
      %p130 = scmp.eq.s32.totalorder %s20, 0
      %p131 = por %p129, %p130
      %p132 = scmp.ne.s32.totalorder %s118, %s119
      %p133 = scmp.eq.s32.totalorder %s21, 1
      %p134 = por %p132, %p133
      %p136 = scmp.ne.s32.totalorder %s119, %s135
      %p137 = scmp.eq.s32.totalorder %s21, 0
      %p138 = por %p136, %p137
      %s140 = sadd.s32 %s139, 1
      %p143 = scmp.eq.s32.totalorder %s15, 1
      %p144 = scmp.ne.s32.totalorder %s139, %s141
      %p145 = scmp.eq.s32.totalorder %s15, 0
      %p146 = por %p144, %p145
      %p147 = scmp.ne.s32.totalorder %s139, %s141
      %p148 = scmp.eq.s32.totalorder %s20, 1
      %p149 = por %p147, %p148
      %p150 = scmp.ne.s32.totalorder %s141, %s142
      %p151 = scmp.eq.s32.totalorder %s20, 0
      %p152 = por %p150, %p151
      %p153 = scmp.ne.s32.totalorder %s141, %s142
      %p154 = scmp.eq.s32.totalorder %s21, 1
      %p155 = por %p153, %p154
      %p157 = scmp.ne.s32.totalorder %s142, %s156
      %p158 = scmp.eq.s32.totalorder %s21, 0
      %p159 = por %p157, %p158
      %s160 = ssub.s32 %s22, %s34
      %p161 = scmp.eq.s32.totalorder %s160, 0
      %s163 = sadd.s32 %s162, 1
      %s164 = scalar_select %p161, %s162, %s163
      %p167 = pneg %p161
      %p168 = scmp.eq.s32.totalorder %s15, 1
      %p169 = por %p167, %p168
      %p170 = scmp.ne.s32.totalorder %s162, %s165
      %p171 = scmp.eq.s32.totalorder %s15, 0
      %p172 = por %p170, %p171
      %p173 = scmp.ne.s32.totalorder %s162, %s165
      %p174 = scmp.eq.s32.totalorder %s20, 1
      %p175 = por %p173, %p174
      %p176 = scmp.ne.s32.totalorder %s165, %s166
      %p177 = scmp.eq.s32.totalorder %s20, 0
      %p178 = por %p176, %p177
      %p179 = scmp.ne.s32.totalorder %s165, %s166
      %p180 = scmp.eq.s32.totalorder %s21, 1
      %p181 = por %p179, %p180
      %p183 = scmp.ne.s32.totalorder %s166, %s182
      %p184 = scmp.eq.s32.totalorder %s21, 0
      %p185 = por %p183, %p184
      %p186 = scmp.le.s32.totalorder 1, %s15
      %p187 = scmp.lt.s32.totalorder %s15, 3
      %p188 = pnand %p186, %p187
      %p189 = pneg %p188
      // Predicated region
      $region9: #{tpu_custom_call.1} parent=5 // pred_check
        _
      $region10: #{tpu_custom_call.1} parent=5 // pred_check_branch
        %191 = sbr.rel (%p188) target = $region12
      $region11: #{tpu_custom_call.1} parent=5 // pred_region
        %s192 = ssub.s32 %s15, 1
        // Predicated region
        $region13: #{tpu_custom_call.1} parent=11 // pred_check
          %p193 = pneg %p79
        $region14: #{tpu_custom_call.1} parent=11 // pred_check_branch
          %195 = sbr.rel (%p193) target = $region16
        $region15: #{tpu_custom_call.1} parent=11 // pred_region
          %p196 = scmp.lt.s32.totalorder %s25, 0
          %s197 = scalar_select %p196, %s25, 0
          %s198 = smul.addr %s197, 4
          %s199 = scalar_lea.vmem %s1, %s198
        $region16: #{tpu_custom_call.1} parent=11 // pred_fallthru
          _
        // Predicated region
        $region17: #{tpu_custom_call.1} parent=11 // pred_check
          %p200 = pneg %p105
        $region18: #{tpu_custom_call.1} parent=11 // pred_check_branch
          %202 = sbr.rel (%p200) target = $region20
        $region19: #{tpu_custom_call.1} parent=11 // pred_region
          %p203 = scmp.lt.s32.totalorder %s25, 0
          %s204 = scalar_select %p203, %s25, 0
          %s205 = scalar_lea.vmem %s2, %s204
        $region20: #{tpu_custom_call.1} parent=11 // pred_fallthru
          _
        // Predicated region
        $region21: #{tpu_custom_call.1} parent=11 // pred_check
          %p206 = pneg %p131
        $region22: #{tpu_custom_call.1} parent=11 // pred_check_branch
          %208 = sbr.rel (%p206) target = $region24
        $region23: #{tpu_custom_call.1} parent=11 // pred_region
          %s209 = smul.u32 16, %s25
          %s211 = ssub.s32 1024, 1024
          %212 = vsyncadd [#allocation4], %s211
          %s213 = smul.addr %s209, 64
          %s214 = scalar_lea.hbm %s3, %s213
          %s215 = sshll.u32 [#allocation3], 4
          %s216 = int_to_ptr.vmem [resolvable:$true] %s215
          %221 = dma.hbm_to_vmem [thread:$0]  %s214, 1024, %s216, [#allocation4], 64, 64, 4
        $region24: #{tpu_custom_call.1} parent=11 // pred_fallthru
          _
        // Predicated region
        $region25: #{tpu_custom_call.1} parent=11 // pred_check
          %p222 = pneg %p152
        $region26: #{tpu_custom_call.1} parent=11 // pred_check_branch
          %224 = sbr.rel (%p222) target = $region28
        $region27: #{tpu_custom_call.1} parent=11 // pred_region
          _
        $region28: #{tpu_custom_call.1} parent=11 // pred_fallthru
          _
      $region12: #{tpu_custom_call.1} parent=5 // pred_fallthru
        _
      %p225 = scmp.lt.s32.totalorder %s15, 2
      // Predicated region
      $region29: #{tpu_custom_call.1} parent=5 // pred_check
        %p226 = pneg %p225
      $region30: #{tpu_custom_call.1} parent=5 // pred_check_branch
        %228 = sbr.rel (%p226) target = $region32
      $region31: #{tpu_custom_call.1} parent=5 // pred_region
        // Predicated region
        $region33: #{tpu_custom_call.1} parent=31 // pred_check
          %p229 = pneg %p47
        $region34: #{tpu_custom_call.1} parent=31 // pred_check_branch
          %231 = sbr.rel (%p229) target = $region36
        $region35: #{tpu_custom_call.1} parent=31 // pred_region
          %s232 = smul.u32 4, %s22
          %p233 = scmp.lt.s32.totalorder %s232, 7
          %s234 = scalar_select %p233, %s232, 7
          %s235 = smul.addr %s234, 4
          %s236 = scalar_lea.vmem %s0, %s235
          %s237 = smul.u32 4, %s22
        $region36: #{tpu_custom_call.1} parent=31 // pred_fallthru
          _
      $region32: #{tpu_custom_call.1} parent=5 // pred_fallthru
        _
      %p238 = scmp.le.s32.totalorder 1, %s15
      %p239 = scmp.lt.s32.totalorder %s15, 3
      %p240 = pnand %p238, %p239
      %p241 = pneg %p240
      // Predicated region
      $region37: #{tpu_custom_call.1} parent=5 // pred_check
        _
      $region38: #{tpu_custom_call.1} parent=5 // pred_check_branch
        %243 = sbr.rel (%p240) target = $region40
      $region39: #{tpu_custom_call.1} parent=5 // pred_region
        %s244 = ssub.s32 %s15, 1
        // Predicated region
        $region41: #{tpu_custom_call.1} parent=39 // pred_check
          %p245 = pneg %p131
        $region42: #{tpu_custom_call.1} parent=39 // pred_check_branch
          %247 = sbr.rel (%p245) target = $region44
        $region43: #{tpu_custom_call.1} parent=39 // pred_region
          %248 = dma.done [#allocation4], 1024
        $region44: #{tpu_custom_call.1} parent=39 // pred_fallthru
          _
        %s249 = smul.u32 4, %s24
        %p250 = scmp.lt.s32.totalorder %s249, 7
        %s251 = scalar_select %p250, %s249, 7
        %s252 = smul.addr %s251, 4
        %s253 = scalar_lea.vmem %s0, %s252
        %p254 = pneg %p53
        %p255 = pneg %p50
        %p256 = scmp.lt.s32.totalorder %s25, 0
        %s257 = scalar_select %p256, %s25, 0
        %s258 = smul.addr %s257, 4
        %s259 = scalar_lea.vmem %s1, %s258
        %p260 = pneg %p79
        %p261 = pneg %p76
        %p262 = scmp.lt.s32.totalorder %s25, 0
        %s263 = scalar_select %p262, %s25, 0
        %s264 = scalar_lea.vmem %s2, %s263
        %p265 = pneg %p105
        %p266 = pneg %p102
        %p267 = pneg %p131
        %p268 = pneg %p128
        %p269 = pneg %p152
        %p270 = pneg %p149
        %p271 = pneg %p178
        %p272 = pneg %p175
        %s273 = sand.u32 %s165, 1
        %s274 = scalar_lea.sflag [#allocation5], %s273
        %s275 = sand.u32 %s165, 1
        %s276 = smul.addr %s275, 32
        %s277 = scalar_lea.vmem [#allocation6], %s276
        %s278 = smul.u32 4, %s24
        %p279 = scmp.lt.s32.totalorder %s278, 7
        %s280 = scalar_select %p279, %s278, 7
        %s281 = smul.addr %s280, 4
        %s282 = scalar_lea.vmem %s0, %s281
        %s283 = smul.u32 4, %s24
        %p284 = scmp.lt.s32.totalorder %s25, 0
        %s285 = scalar_select %p284, %s25, 0
        %s286 = smul.addr %s285, 4
        %s287 = scalar_lea.vmem %s1, %s286
        %p288 = scmp.lt.s32.totalorder %s25, 0
        %s289 = scalar_select %p288, %s25, 0
        %s290 = scalar_lea.vmem %s2, %s289
        %s291 = smul.u32 16, %s25
        %s292 = smul.u32 4, %s24
        %p294 = scmp.eq.s32.totalorder %s25, 0
        // Predicated region
        $region45: #{tpu_custom_call.1} parent=39 // pred_check
          %p295 = pneg %p294
        $region46: #{tpu_custom_call.1} parent=39 // pred_check_branch
          %297 = sbr.rel (%p295) target = $region48
        $region47: #{tpu_custom_call.1} parent=39 // pred_region
          %298 = vst [vmem:[#allocation2] sm:$0xff] 0.0
          %299 = vst [vmem:[#allocation2 + $0x8] sm:$0xff] 0.0
          %300 = vst [vmem:[#allocation2 + $0x10] sm:$0xff] 0.0
          %301 = vst [vmem:[#allocation2 + $0x18] sm:$0xff] 0.0
        $region48: #{tpu_custom_call.1} parent=39 // pred_fallthru
          _
        %v302 = vld [vmem:[%s282] sm:$0xf]
        %v303 = vld [vmem:[%s282 + $0x4] sm:$0xf]
        %v304 = vld [vmem:[%s282 + $0x8] sm:$0xf]
        %v305 = vld [vmem:[%s282 + $0xc] sm:$0xf]
        %v306 = vld [vmem:[%s287] sm:$0xf]
        %v307 = vld [vmem:[%s287 + $0x4] sm:$0xf]
        %v308 = vld [vmem:[%s290] sm:$0x1]
        %v310 = vlaneseq
        %v311 = vshrl.u32 %v310, 7
        %v312 = vsub.s32 0, %v311
        %v313 = vrot.slane %v308, %v312
        %v319 = vunpack.c.l.b16 %v302
        %v320 = vunpack.c.l.b16 %v303
        %v321 = vunpack.c.l.b16 %v304
        %v322 = vunpack.c.l.b16 %v305
        %v323 = vpack.c.b16 %v320, %v319
        %v324 = vpack.c.b16 %v322, %v321
        %v327 = vunpack.c.l.b16 %v306
        %v328 = vunpack.c.l.b16 %v307
        %v329 = vpack.c.b16 %v328, %v327
        %vm331 = vcmask 130048
        %v333 = vsel %vm331, %v323, 0
        %v336 = vsel %vm331, %v324, 0
        %338 = vmatprep.subr.bf16.mxu0 0
        %339 = vmatpush1.bf16.msra.mxu0 %v329
        %340 = vmatprep.subr.bf16.mxu0 0
        %341 = vmatpush1.bf16.msra.mxu0 0
        %342 = vmatprep.subr.bf16.mxu0 0
        %343 = vmatpush1.bf16.msra.mxu0 0
        %344 = vmatprep.subr.bf16.mxu0 0
        %345 = vmatpush1.bf16.msra.mxu0 0
        %346 = vmatprep.subr.bf16.mxu0 0
        %347 = vmatpush1.bf16.msra.mxu0 0
        %348 = vmatprep.subr.bf16.mxu0 0
        %349 = vmatpush1.bf16.msra.mxu0 0
        %350 = vmatprep.subr.bf16.mxu0 0
        %351 = vmatpush1.bf16.msra.mxu0 0
        %352 = vmatprep.subr.bf16.mxu0 0
        %353 = vmatpush1.bf16.msra.mxu0 0
        %354 = vmatprep.subr.bf16.mxu0 0
        %355 = vmatpush1.bf16.msra.mxu0 0
        %356 = vmatprep.subr.bf16.mxu0 0
        %357 = vmatpush1.bf16.msra.mxu0 0
        %358 = vmatprep.subr.bf16.mxu0 0
        %359 = vmatpush1.bf16.msra.mxu0 0
        %360 = vmatprep.subr.bf16.mxu0 0
        %361 = vmatpush1.bf16.msra.mxu0 0
        %362 = vmatprep.subr.bf16.mxu0 0
        %363 = vmatpush1.bf16.msra.mxu0 0
        %364 = vmatprep.subr.bf16.mxu0 0
        %365 = vmatpush1.bf16.msra.mxu0 0
        %366 = vmatprep.subr.bf16.mxu0 0
        %367 = vmatpush1.bf16.msra.mxu0 0
        %368 = vmatprep.subr.bf16.mxu0 0
        %369 = vmatpush1.bf16.msra.mxu0 0
        %370 = vmatprep.mubr.bf16.mxu0 0
        %371 = vmatmul.mubr.bf16.gmra.mrb[0].mxu0 %v333
        %v372 = vpop.f32.mrb[0].mxu0
        %v373 = vadd.f32 %v313, %v372
        %v374 = vpop.f32.mrb[0].mxu0
        %v375 = vpop.f32.mrb[0].mxu0
        %v376 = vadd.f32 %v313, %v375
        %v377 = vpop.f32.mrb[0].mxu0
        %378 = vmatprep.mubr.bf16.mxu0 0
        %379 = vmatmul.mubr.bf16.gmra.mrb[0].mxu0 %v336
        %v380 = vpop.f32.mrb[0].mxu0
        %v381 = vadd.f32 %v313, %v380
        %v382 = vpop.f32.mrb[0].mxu0
        %v383 = vpop.f32.mrb[0].mxu0
        %v384 = vadd.f32 %v313, %v383
        %v385 = vpop.f32.mrb[0].mxu0
        %386 = vdwg.mxu0
        %v387 = vmax.f32 %v373, 0.0
        %v388 = vmax.f32 %v376, 0.0
        %v389 = vmax.f32 %v381, 0.0
        %v390 = vmax.f32 %v384, 0.0
        %v391 = vld [vmem:[#allocation2] sm:$0xff]
        %v392 = vld [vmem:[#allocation2 + $0x8] sm:$0xff]
        %v393 = vld [vmem:[#allocation2 + $0x10] sm:$0xff]
        %v394 = vld [vmem:[#allocation2 + $0x18] sm:$0xff]
        %v395 = vpack.c.bf16 %v388, %v387
        %v396 = vpack.c.bf16 %v390, %v389
        %v397 = vld [vmem:[#allocation3] sm:$0xf]
        %v398 = vld [vmem:[#allocation3 + $0x4] sm:$0xf]
        %v399 = vld [vmem:[#allocation3 + $0x8] sm:$0xf]
        %v400 = vld [vmem:[#allocation3 + $0xc] sm:$0xf]
        %v401 = vld [vmem:[#allocation3 + $0x10] sm:$0xf]
        %v402 = vld [vmem:[#allocation3 + $0x14] sm:$0xf]
        %v403 = vld [vmem:[#allocation3 + $0x18] sm:$0xf]
        %v404 = vld [vmem:[#allocation3 + $0x1c] sm:$0xf]
        %v405 = vld [vmem:[#allocation3 + $0x20] sm:$0xf]
        %v406 = vld [vmem:[#allocation3 + $0x24] sm:$0xf]
        %v407 = vld [vmem:[#allocation3 + $0x28] sm:$0xf]
        %v408 = vld [vmem:[#allocation3 + $0x2c] sm:$0xf]
        %v409 = vld [vmem:[#allocation3 + $0x30] sm:$0xf]
        %v410 = vld [vmem:[#allocation3 + $0x34] sm:$0xf]
        %v411 = vld [vmem:[#allocation3 + $0x38] sm:$0xf]
        %v412 = vld [vmem:[#allocation3 + $0x3c] sm:$0xf]
        %v429 = vunpack.c.l.b16 %v397
        %v430 = vunpack.c.l.b16 %v398
        %v431 = vunpack.c.l.b16 %v399
        %v432 = vunpack.c.l.b16 %v400
        %v433 = vunpack.c.l.b16 %v401
        %v434 = vunpack.c.l.b16 %v402
        %v435 = vunpack.c.l.b16 %v403
        %v436 = vunpack.c.l.b16 %v404
        %v437 = vunpack.c.l.b16 %v405
        %v438 = vunpack.c.l.b16 %v406
        %v439 = vunpack.c.l.b16 %v407
        %v440 = vunpack.c.l.b16 %v408
        %v441 = vunpack.c.l.b16 %v409
        %v442 = vunpack.c.l.b16 %v410
        %v443 = vunpack.c.l.b16 %v411
        %v444 = vunpack.c.l.b16 %v412
        %v445 = vpack.c.b16 %v430, %v429
        %v446 = vpack.c.b16 %v432, %v431
        %v447 = vpack.c.b16 %v434, %v433
        %v448 = vpack.c.b16 %v436, %v435
        %v449 = vpack.c.b16 %v438, %v437
        %v450 = vpack.c.b16 %v440, %v439
        %v451 = vpack.c.b16 %v442, %v441
        %v452 = vpack.c.b16 %v444, %v443
        %461 = vmatprep.subr.bf16.mxu0 0
        %462 = vmatpush1.bf16.msra.mxu0 %v445
        %463 = vmatprep.subr.bf16.mxu0 0
        %464 = vmatpush1.bf16.msra.mxu0 %v446
        %465 = vmatprep.subr.bf16.mxu0 0
        %466 = vmatpush1.bf16.msra.mxu0 %v447
        %467 = vmatprep.subr.bf16.mxu0 0
        %468 = vmatpush1.bf16.msra.mxu0 %v448
        %469 = vmatprep.subr.bf16.mxu0 0
        %470 = vmatpush1.bf16.msra.mxu0 %v449
        %471 = vmatprep.subr.bf16.mxu0 0
        %472 = vmatpush1.bf16.msra.mxu0 %v450
        %473 = vmatprep.subr.bf16.mxu0 0
        %474 = vmatpush1.bf16.msra.mxu0 %v451
        %475 = vmatprep.subr.bf16.mxu0 0
        %476 = vmatpush1.bf16.msra.mxu0 %v452
        %477 = vmatprep.subr.bf16.mxu0 0
        %478 = vmatpush1.bf16.msra.mxu0 0
        %479 = vmatprep.subr.bf16.mxu0 0
        %480 = vmatpush1.bf16.msra.mxu0 0
        %481 = vmatprep.subr.bf16.mxu0 0
        %482 = vmatpush1.bf16.msra.mxu0 0
        %483 = vmatprep.subr.bf16.mxu0 0
        %484 = vmatpush1.bf16.msra.mxu0 0
        %485 = vmatprep.subr.bf16.mxu0 0
        %486 = vmatpush1.bf16.msra.mxu0 0
        %487 = vmatprep.subr.bf16.mxu0 0
        %488 = vmatpush1.bf16.msra.mxu0 0
        %489 = vmatprep.subr.bf16.mxu0 0
        %490 = vmatpush1.bf16.msra.mxu0 0
        %491 = vmatprep.subr.bf16.mxu0 0
        %492 = vmatpush1.bf16.msra.mxu0 0
        %493 = vmatprep.mubr.bf16.mxu0 0
        %494 = vmatmul.mubr.bf16.gmra.mrb[0].mxu0 %v395
        %v495 = vpop.f32.mrb[0].mxu0
        %v496 = vadd.f32 0.0, %v495
        %v497 = vpop.f32.mrb[0].mxu0
        %v498 = vpop.f32.mrb[0].mxu0
        %v499 = vadd.f32 0.0, %v498
        %v500 = vpop.f32.mrb[0].mxu0
        %501 = vmatprep.mubr.bf16.mxu0 0
        %502 = vmatmul.mubr.bf16.gmra.mrb[0].mxu0 %v396
        %v503 = vpop.f32.mrb[0].mxu0
        %v504 = vadd.f32 0.0, %v503
        %v505 = vpop.f32.mrb[0].mxu0
        %v506 = vpop.f32.mrb[0].mxu0
        %v507 = vadd.f32 0.0, %v506
        %v508 = vpop.f32.mrb[0].mxu0
        %509 = vdwg.mxu0
        %v510 = vadd.f32 %v391, %v496
        %v511 = vadd.f32 %v392, %v499
        %v512 = vadd.f32 %v393, %v504
        %v513 = vadd.f32 %v394, %v507
        %514 = vst [vmem:[#allocation2] sm:$0xff] %v510
        %515 = vst [vmem:[#allocation2 + $0x8] sm:$0xff] %v511
        %516 = vst [vmem:[#allocation2 + $0x10] sm:$0xff] %v512
        %517 = vst [vmem:[#allocation2 + $0x18] sm:$0xff] %v513
        // Predicated region
        $region49: #{tpu_custom_call.1} parent=39 // pred_check
          %p518 = pneg %p294
        $region50: #{tpu_custom_call.1} parent=39 // pred_check_branch
          %520 = sbr.rel (%p518) target = $region52
        $region51: #{tpu_custom_call.1} parent=39 // pred_region
          %v521 = vld [vmem:[#allocation2] sm:$0xff]
          %v522 = vld [vmem:[#allocation2 + $0x8] sm:$0xff]
          %v523 = vld [vmem:[#allocation2 + $0x10] sm:$0xff]
          %v524 = vld [vmem:[#allocation2 + $0x18] sm:$0xff]
          %v525 = vld [vmem:[%s4] sm:$0x1]
          %v527 = vlaneseq
          %v528 = vshrl.u32 %v527, 7
          %v529 = vsub.s32 0, %v528
          %v530 = vrot.slane %v525, %v529
          %v532 = vadd.f32 %v521, %v530
          %v533 = vadd.f32 %v522, %v530
          %v534 = vadd.f32 %v523, %v530
          %v535 = vadd.f32 %v524, %v530
          %536 = vst [vmem:[%s277] sm:$0xff] %v532
          %537 = vst [vmem:[%s277 + $0x8] sm:$0xff] %v533
          %538 = vst [vmem:[%s277 + $0x10] sm:$0xff] %v534
          %539 = vst [vmem:[%s277 + $0x18] sm:$0xff] %v535
        $region52: #{tpu_custom_call.1} parent=39 // pred_fallthru
          _
        %s540 = sand.u32 %s165, 1
        %s541 = scalar_lea.sflag [#allocation5], %s540
        %s542 = sand.u32 %s165, 1
        %s543 = smul.addr %s542, 32
        %s544 = scalar_lea.vmem [#allocation6], %s543
        // Predicated region
        $region53: #{tpu_custom_call.1} parent=39 // pred_check
          %p545 = pneg %p175
        $region54: #{tpu_custom_call.1} parent=39 // pred_check_branch
          %547 = sbr.rel (%p545) target = $region56
        $region55: #{tpu_custom_call.1} parent=39 // pred_region
          %s548 = smul.u32 4, %s24
          %s550 = ssub.s32 512, 512
          %551 = vsyncadd %s541, %s550
          %s552 = smul.addr %s548, 128
          %s553 = scalar_lea.hbm %s5, %s552
          %s554 = sshll.u32 %s544, 4
          %s555 = int_to_ptr.vmem [resolvable:$true] %s554
          %560 = dma.vmem_to_hbm [thread:$0]  %s555, 512, %s553, %s541, 128, 128, 8
        $region56: #{tpu_custom_call.1} parent=39 // pred_fallthru
          _
      $region40: #{tpu_custom_call.1} parent=5 // pred_fallthru
        _
      %p561 = scmp.le.s32.totalorder 2, %s15
      // Predicated region
      $region57: #{tpu_custom_call.1} parent=5 // pred_check
        %p562 = pneg %p561
      $region58: #{tpu_custom_call.1} parent=5 // pred_check_branch
        %564 = sbr.rel (%p562) target = $region60
      $region59: #{tpu_custom_call.1} parent=5 // pred_region
        %s565 = ssub.s32 %s15, 2
        // Predicated region
        $region61: #{tpu_custom_call.1} parent=59 // pred_check
          %p566 = pneg %p181
        $region62: #{tpu_custom_call.1} parent=59 // pred_check_branch
          %568 = sbr.rel (%p566) target = $region64
        $region63: #{tpu_custom_call.1} parent=59 // pred_region
          %s569 = sand.u32 %s166, 1
          %s570 = scalar_lea.sflag [#allocation5], %s569
          %s571 = sand.u32 %s166, 1
          %s572 = smul.addr %s571, 32
          %s573 = scalar_lea.vmem [#allocation6], %s572
          %574 = dma.done %s570, 512
        $region64: #{tpu_custom_call.1} parent=59 // pred_fallthru
          _
      $region60: #{tpu_custom_call.1} parent=5 // pred_fallthru
        _
    $region6: #{tpu_custom_call.1} parent=1 // loop_footer
      %s19 = sadd.s32 1, %s15
    $region7: #{tpu_custom_call.1} parent=1 // loop_footer_branch
      %14 = sbr.rel target = $region3
    $region8: #{tpu_custom_call.1} parent=1 // loop_exit
      _
    %575 = vsyncpa [#allocation4], 1
    %s576 = scalar_lea.sflag [#allocation4], 1
    %577 = vsyncpa %s576, 1
    %578 = vsyncpa [#allocation5], 1
    %s579 = scalar_lea.sflag [#allocation5], 1
    %580 = vsyncpa %s579, 1

// kernel: tpu_custom_call.1
$region0: #{tpu_custom_call.1}
  #allocation0 [shape = 'u32[]', space=smem, size = 0x4, offset = 0x4, fixed_abs, tag = 'smem constant byte address 0x4 - core index']
  #allocation1 [shape = 'u32[144,128]{1,0:T(1,128)}', space=vmem, size = 0x12000, scoped, tag = 'internal scratch']
  #allocation2 [shape = 'f32[32,128]{1,0:T(8,128)}', space=vmem, size = 0x4000, scoped, tag = 'scratch operand']
  %s0 = inlined_call_operand.vmem [shape: bf16[64,16], index: 0, kind: input, shape index: {}]
  %s1 = inlined_call_operand.vmem [shape: bf16[16,128], index: 1, kind: input, shape index: {}]
  %s2 = inlined_call_operand.vmem [shape: f32[1,128], index: 2, kind: input, shape index: {}]
  %s3 = inlined_call_operand.hbm [shape: bf16[128,128], index: 3, kind: input, shape index: {}]
  %s4 = inlined_call_operand.vmem [shape: f32[1,128], index: 4, kind: input, shape index: {}]
  %s5 = inlined_call_operand.hbm [shape: f32[64,128], index: 5, kind: output, shape index: {}]
  %s6 = sld [smem:[#allocation0]]
  $region65: #{tpu_custom_call.1} parent=0
    _
  %s8 = ssub.s32 1, %s6
  %s9 = scalar_select 0, %s8, %s6
  $region1: #{tpu_custom_call.1} parent=0
    #allocation3 [shape = 'u8[32768]{0}', space=vmem, size = 0x8000, scoped, tag = 'input window, operand 3, single buffered']
    #allocation4 [shape = 's32[2]{0}', space=sflag, size = 0x8, scoped, tag = 'scoped memory for tpu_custom_call.1']
    #allocation5 [shape = 's32[2]{0}', space=sflag, size = 0x8, scoped, tag = 'scoped memory for tpu_custom_call.1']
    #allocation6 [shape = 'u8[32768]{0}', space=vmem, size = 0x8000, scoped, tag = 'output window, operand 0']
    %10 = vsyncpa [#allocation4], 0
    %11 = vsyncpa [#allocation5], 0
    %s12 = scalar_lea.sflag [#allocation5], 1
    %13 = vsyncpa %s12, 0
    loop: start=0, step=1, limit=4
    $region2: #{tpu_custom_call.1} parent=1 // loop_pre_header
      _
    $region3: #{tpu_custom_call.1} parent=1 // loop_header
      %s15 = sphi 0, %s19
      %p16 = scmp.ge.s32.totalorder %s15, 4
      %s22 = sphi 0, %s34
      %s23 = sphi 0, %s30
      %s24 = sphi 0, %s22
      %s25 = sphi 0, %s23
      %s26 = sphi 0, %s24
      %s27 = sphi 0, %s25
      %s37 = sphi 0, %s39
      %s40 = sphi 0, %s37
      %s41 = sphi 0, %s40
      %s57 = sphi 0, %s41
      %s63 = sphi 0, %s65
      %s66 = sphi 0, %s63
      %s67 = sphi 0, %s66
      %s83 = sphi 0, %s67
      %s89 = sphi 0, %s91
      %s92 = sphi 0, %s89
      %s93 = sphi 0, %s92
      %s109 = sphi 0, %s93
      %s115 = sphi 0, %s117
      %s118 = sphi 0, %s115
      %s119 = sphi 0, %s118
      %s135 = sphi 0, %s119
      %s139 = sphi 0, %s139
      %s141 = sphi 0, %s139
      %s142 = sphi 0, %s141
      %s156 = sphi 0, %s142
      %s162 = sphi 0, %s164
      %s165 = sphi 0, %s162
      %s166 = sphi 0, %s165
      %s182 = sphi 0, %s166
    $region4: #{tpu_custom_call.1} parent=1 // loop_header_branch
      %18 = sbr.rel (%p16) target = $region8
    $region5: #{tpu_custom_call.1} parent=1 // loop_body
      %s20 = ssub.s32 %s15, 1
      %s21 = ssub.s32 %s15, 2
      %s28 = sadd.s32 1, %s23
      %p29 = scmp.ge.s32.totalorder %s28, 1
      %s30 = scalar_select %p29, 0, %s28
      %s31 = sadd.s32 1, %s22
      %s32 = scalar_select %p29, %s31, %s22
      %p33 = scmp.ge.s32.totalorder %s32, 2
      %s34 = scalar_select %p33, 0, %s32
      %s35 = ssub.s32 %s22, %s34
      %p36 = scmp.eq.s32.totalorder %s35, 0
      %s38 = sadd.s32 %s37, 1
      %s39 = scalar_select %p36, %s37, %s38
      %p42 = pneg %p36
      %p43 = scmp.eq.s32.totalorder %s15, 1
      %p44 = por %p42, %p43
      %p45 = scmp.ne.s32.totalorder %s37, %s40
      %p46 = scmp.eq.s32.totalorder %s15, 0
      %p47 = por %p45, %p46
      %p48 = scmp.ne.s32.totalorder %s37, %s40
      %p49 = scmp.eq.s32.totalorder %s20, 1
      %p50 = por %p48, %p49
      %p51 = scmp.ne.s32.totalorder %s40, %s41
      %p52 = scmp.eq.s32.totalorder %s20, 0
      %p53 = por %p51, %p52
      %p54 = scmp.ne.s32.totalorder %s40, %s41
      %p55 = scmp.eq.s32.totalorder %s21, 1
      %p56 = por %p54, %p55
      %p58 = scmp.ne.s32.totalorder %s41, %s57
      %p59 = scmp.eq.s32.totalorder %s21, 0
      %p60 = por %p58, %p59
      %s61 = ssub.s32 %s23, %s30
      %p62 = scmp.eq.s32.totalorder %s61, 0
      %s64 = sadd.s32 %s63, 1
      %s65 = scalar_select %p62, %s63, %s64
      %p68 = pneg %p62
      %p69 = scmp.eq.s32.totalorder %s15, 1
      %p70 = por %p68, %p69
      %p71 = scmp.ne.s32.totalorder %s63, %s66
      %p72 = scmp.eq.s32.totalorder %s15, 0
      %p73 = por %p71, %p72
      %p74 = scmp.ne.s32.totalorder %s63, %s66
      %p75 = scmp.eq.s32.totalorder %s20, 1
      %p76 = por %p74, %p75
      %p77 = scmp.ne.s32.totalorder %s66, %s67
      %p78 = scmp.eq.s32.totalorder %s20, 0
      %p79 = por %p77, %p78
      %p80 = scmp.ne.s32.totalorder %s66, %s67
      %p81 = scmp.eq.s32.totalorder %s21, 1
      %p82 = por %p80, %p81
      %p84 = scmp.ne.s32.totalorder %s67, %s83
      %p85 = scmp.eq.s32.totalorder %s21, 0
      %p86 = por %p84, %p85
      %s87 = ssub.s32 %s23, %s30
      %p88 = scmp.eq.s32.totalorder %s87, 0
      %s90 = sadd.s32 %s89, 1
      %s91 = scalar_select %p88, %s89, %s90
      %p94 = pneg %p88
      %p95 = scmp.eq.s32.totalorder %s15, 1
      %p96 = por %p94, %p95
      %p97 = scmp.ne.s32.totalorder %s89, %s92
      %p98 = scmp.eq.s32.totalorder %s15, 0
      %p99 = por %p97, %p98
      %p100 = scmp.ne.s32.totalorder %s89, %s92
      %p101 = scmp.eq.s32.totalorder %s20, 1
      %p102 = por %p100, %p101
      %p103 = scmp.ne.s32.totalorder %s92, %s93
      %p104 = scmp.eq.s32.totalorder %s20, 0
      %p105 = por %p103, %p104
      %p106 = scmp.ne.s32.totalorder %s92, %s93
      %p107 = scmp.eq.s32.totalorder %s21, 1
      %p108 = por %p106, %p107
      %p110 = scmp.ne.s32.totalorder %s93, %s109
      %p111 = scmp.eq.s32.totalorder %s21, 0
      %p112 = por %p110, %p111
      %s113 = ssub.s32 %s23, %s30
      %p114 = scmp.eq.s32.totalorder %s113, 0
      %s116 = sadd.s32 %s115, 1
      %s117 = scalar_select %p114, %s115, %s116
      %p120 = pneg %p114
      %p121 = scmp.eq.s32.totalorder %s15, 1
      %p122 = por %p120, %p121
      %p123 = scmp.ne.s32.totalorder %s115, %s118
      %p124 = scmp.eq.s32.totalorder %s15, 0
      %p125 = por %p123, %p124
      %p126 = scmp.ne.s32.totalorder %s115, %s118
      %p127 = scmp.eq.s32.totalorder %s20, 1
      %p128 = por %p126, %p127
      %p129 = scmp.ne.s32.totalorder %s118, %s119
      %p130 = scmp.eq.s32.totalorder %s20, 0
      %p131 = por %p129, %p130
      %p132 = scmp.ne.s32.totalorder %s118, %s119
      %p133 = scmp.eq.s32.totalorder %s21, 1
      %p134 = por %p132, %p133
      %p136 = scmp.ne.s32.totalorder %s119, %s135
      %p137 = scmp.eq.s32.totalorder %s21, 0
      %p138 = por %p136, %p137
      %s140 = sadd.s32 %s139, 1
      %p143 = scmp.eq.s32.totalorder %s15, 1
      %p144 = scmp.ne.s32.totalorder %s139, %s141
      %p145 = scmp.eq.s32.totalorder %s15, 0
      %p146 = por %p144, %p145
      %p147 = scmp.ne.s32.totalorder %s139, %s141
      %p148 = scmp.eq.s32.totalorder %s20, 1
      %p149 = por %p147, %p148
      %p150 = scmp.ne.s32.totalorder %s141, %s142
      %p151 = scmp.eq.s32.totalorder %s20, 0
      %p152 = por %p150, %p151
      %p153 = scmp.ne.s32.totalorder %s141, %s142
      %p154 = scmp.eq.s32.totalorder %s21, 1
      %p155 = por %p153, %p154
      %p157 = scmp.ne.s32.totalorder %s142, %s156
      %p158 = scmp.eq.s32.totalorder %s21, 0
      %p159 = por %p157, %p158
      %s160 = ssub.s32 %s22, %s34
      %p161 = scmp.eq.s32.totalorder %s160, 0
      %s163 = sadd.s32 %s162, 1
      %s164 = scalar_select %p161, %s162, %s163
      %p167 = pneg %p161
      %p168 = scmp.eq.s32.totalorder %s15, 1
      %p169 = por %p167, %p168
      %p170 = scmp.ne.s32.totalorder %s162, %s165
      %p171 = scmp.eq.s32.totalorder %s15, 0
      %p172 = por %p170, %p171
      %p173 = scmp.ne.s32.totalorder %s162, %s165
      %p174 = scmp.eq.s32.totalorder %s20, 1
      %p175 = por %p173, %p174
      %p176 = scmp.ne.s32.totalorder %s165, %s166
      %p177 = scmp.eq.s32.totalorder %s20, 0
      %p178 = por %p176, %p177
      %p179 = scmp.ne.s32.totalorder %s165, %s166
      %p180 = scmp.eq.s32.totalorder %s21, 1
      %p181 = por %p179, %p180
      %p183 = scmp.ne.s32.totalorder %s166, %s182
      %p184 = scmp.eq.s32.totalorder %s21, 0
      %p185 = por %p183, %p184
      %p186 = scmp.le.s32.totalorder 1, %s15
      %p187 = scmp.lt.s32.totalorder %s15, 3
      %p188 = pnand %p186, %p187
      %p189 = pneg %p188
      // Predicated region
      $region9: #{tpu_custom_call.1} parent=5 // pred_check
        _
      $region10: #{tpu_custom_call.1} parent=5 // pred_check_branch
        %191 = sbr.rel (%p188) target = $region12
      $region11: #{tpu_custom_call.1} parent=5 // pred_region
        %s192 = ssub.s32 %s15, 1
        // Predicated region
        $region13: #{tpu_custom_call.1} parent=11 // pred_check
          %p193 = pneg %p79
        $region14: #{tpu_custom_call.1} parent=11 // pred_check_branch
          %195 = sbr.rel (%p193) target = $region16
        $region15: #{tpu_custom_call.1} parent=11 // pred_region
          %p196 = scmp.lt.s32.totalorder %s25, 0
          %s197 = scalar_select %p196, %s25, 0
          %s198 = smul.addr %s197, 4
          %s199 = scalar_lea.vmem %s1, %s198
        $region16: #{tpu_custom_call.1} parent=11 // pred_fallthru
          _
        // Predicated region
        $region17: #{tpu_custom_call.1} parent=11 // pred_check
          %p200 = pneg %p105
        $region18: #{tpu_custom_call.1} parent=11 // pred_check_branch
          %202 = sbr.rel (%p200) target = $region20
        $region19: #{tpu_custom_call.1} parent=11 // pred_region
          %p203 = scmp.lt.s32.totalorder %s25, 0
          %s204 = scalar_select %p203, %s25, 0
          %s205 = scalar_lea.vmem %s2, %s204
        $region20: #{tpu_custom_call.1} parent=11 // pred_fallthru
          _
        // Predicated region
        $region21: #{tpu_custom_call.1} parent=11 // pred_check
          %p206 = pneg %p131
        $region22: #{tpu_custom_call.1} parent=11 // pred_check_branch
          %208 = sbr.rel (%p206) target = $region24
        $region23: #{tpu_custom_call.1} parent=11 // pred_region
          %s209 = smul.u32 16, %s25
          %s211 = ssub.s32 1024, 1024
          %212 = vsyncadd [#allocation4], %s211
          %s213 = smul.addr %s209, 64
          %s214 = scalar_lea.hbm %s3, %s213
          %s215 = sshll.u32 [#allocation3], 4
          %s216 = int_to_ptr.vmem [resolvable:$true] %s215
          %221 = dma.hbm_to_vmem [thread:$0]  %s214, 1024, %s216, [#allocation4], 64, 64, 4
        $region24: #{tpu_custom_call.1} parent=11 // pred_fallthru
          _
        // Predicated region
        $region25: #{tpu_custom_call.1} parent=11 // pred_check
          %p222 = pneg %p152
        $region26: #{tpu_custom_call.1} parent=11 // pred_check_branch
          %224 = sbr.rel (%p222) target = $region28
        $region27: #{tpu_custom_call.1} parent=11 // pred_region
          _
        $region28: #{tpu_custom_call.1} parent=11 // pred_fallthru
          _
      $region12: #{tpu_custom_call.1} parent=5 // pred_fallthru
        _
      %p225 = scmp.lt.s32.totalorder %s15, 2
      // Predicated region
      $region29: #{tpu_custom_call.1} parent=5 // pred_check
        %p226 = pneg %p225
      $region30: #{tpu_custom_call.1} parent=5 // pred_check_branch
        %228 = sbr.rel (%p226) target = $region32
      $region31: #{tpu_custom_call.1} parent=5 // pred_region
        // Predicated region
        $region33: #{tpu_custom_call.1} parent=31 // pred_check
          %p229 = pneg %p47
        $region34: #{tpu_custom_call.1} parent=31 // pred_check_branch
          %231 = sbr.rel (%p229) target = $region36
        $region35: #{tpu_custom_call.1} parent=31 // pred_region
          %s232 = smul.u32 4, %s22
          %p233 = scmp.lt.s32.totalorder %s232, 7
          %s234 = scalar_select %p233, %s232, 7
          %s235 = smul.addr %s234, 4
          %s236 = scalar_lea.vmem %s0, %s235
          %s237 = smul.u32 4, %s22
        $region36: #{tpu_custom_call.1} parent=31 // pred_fallthru
          _
      $region32: #{tpu_custom_call.1} parent=5 // pred_fallthru
        _
      %p238 = scmp.le.s32.totalorder 1, %s15
      %p239 = scmp.lt.s32.totalorder %s15, 3
      %p240 = pnand %p238, %p239
      %p241 = pneg %p240
      // Predicated region
      $region37: #{tpu_custom_call.1} parent=5 // pred_check
        _
      $region38: #{tpu_custom_call.1} parent=5 // pred_check_branch
        %243 = sbr.rel (%p240) target = $region40
      $region39: #{tpu_custom_call.1} parent=5 // pred_region
        %s244 = ssub.s32 %s15, 1
        // Predicated region
        $region41: #{tpu_custom_call.1} parent=39 // pred_check
          %p245 = pneg %p131
        $region42: #{tpu_custom_call.1} parent=39 // pred_check_branch
          %247 = sbr.rel (%p245) target = $region44
        $region43: #{tpu_custom_call.1} parent=39 // pred_region
          %248 = dma.done [#allocation4], 1024
        $region44: #{tpu_custom_call.1} parent=39 // pred_fallthru
          _
        %s249 = smul.u32 4, %s24
        %p250 = scmp.lt.s32.totalorder %s249, 7
        %s251 = scalar_select %p250, %s249, 7
        %s252 = smul.addr %s251, 4
        %s253 = scalar_lea.vmem %s0, %s252
        %p254 = pneg %p53
        %p255 = pneg %p50
        %p256 = scmp.lt.s32.totalorder %s25, 0
        %s257 = scalar_select %p256, %s25, 0
        %s258 = smul.addr %s257, 4
        %s259 = scalar_lea.vmem %s1, %s258
        %p260 = pneg %p79
        %p261 = pneg %p76
        %p262 = scmp.lt.s32.totalorder %s25, 0
        %s263 = scalar_select %p262, %s25, 0
        %s264 = scalar_lea.vmem %s2, %s263
        %p265 = pneg %p105
        %p266 = pneg %p102
        %p267 = pneg %p131
        %p268 = pneg %p128
        %p269 = pneg %p152
        %p270 = pneg %p149
        %p271 = pneg %p178
        %p272 = pneg %p175
        %s273 = sand.u32 %s165, 1
        %s274 = scalar_lea.sflag [#allocation5], %s273
        %s275 = sand.u32 %s165, 1
        %s276 = smul.addr %s275, 32
        %s277 = scalar_lea.vmem [#allocation6], %s276
        %s278 = smul.u32 4, %s24
        %p279 = scmp.lt.s32.totalorder %s278, 7
        %s280 = scalar_select %p279, %s278, 7
        %s281 = smul.addr %s280, 4
        %s282 = scalar_lea.vmem %s0, %s281
        %s283 = smul.u32 4, %s24
        %p284 = scmp.lt.s32.totalorder %s25, 0
        %s285 = scalar_select %p284, %s25, 0
        %s286 = smul.addr %s285, 4
        %s287 = scalar_lea.vmem %s1, %s286
        %p288 = scmp.lt.s32.totalorder %s25, 0
        %s289 = scalar_select %p288, %s25, 0
        %s290 = scalar_lea.vmem %s2, %s289
        %s291 = smul.u32 16, %s25
        %s292 = smul.u32 4, %s24
        %p294 = scmp.eq.s32.totalorder %s25, 0
        // Predicated region
        $region45: #{tpu_custom_call.1} parent=39 // pred_check
          %p295 = pneg %p294
        $region46: #{tpu_custom_call.1} parent=39 // pred_check_branch
          %297 = sbr.rel (%p295) target = $region48
        $region47: #{tpu_custom_call.1} parent=39 // pred_region
          %298 = vst [vmem:[#allocation2] sm:$0xff] 0.0
          %299 = vst [vmem:[#allocation2 + $0x8] sm:$0xff] 0.0
          %300 = vst [vmem:[#allocation2 + $0x10] sm:$0xff] 0.0
          %301 = vst [vmem:[#allocation2 + $0x18] sm:$0xff] 0.0
        $region48: #{tpu_custom_call.1} parent=39 // pred_fallthru
          _
        %v302 = vld [vmem:[%s282] sm:$0xf]
        %v303 = vld [vmem:[%s282 + $0x4] sm:$0xf]
        %v304 = vld [vmem:[%s282 + $0x8] sm:$0xf]
        %v305 = vld [vmem:[%s282 + $0xc] sm:$0xf]
        %v306 = vld [vmem:[%s287] sm:$0xf]
        %v307 = vld [vmem:[%s287 + $0x4] sm:$0xf]
        %v308 = vld [vmem:[%s290] sm:$0x1]
        %v310 = vlaneseq
        %v311 = vshrl.u32 %v310, 7
        %v312 = vsub.s32 0, %v311
        %v313 = vrot.slane %v308, %v312
        %v319 = vunpack.c.l.b16 %v302
        %v320 = vunpack.c.l.b16 %v303
        %v321 = vunpack.c.l.b16 %v304
        %v322 = vunpack.c.l.b16 %v305
        %v323 = vpack.c.b16 %v320, %v319
        %v324 = vpack.c.b16 %v322, %v321
        %v327 = vunpack.c.l.b16 %v306
        %v328 = vunpack.c.l.b16 %v307
        %v329 = vpack.c.b16 %v328, %v327
        %vm331 = vcmask 130048
        %v333 = vsel %vm331, %v323, 0
        %v336 = vsel %vm331, %v324, 0
        %338 = vmatprep.subr.bf16.mxu0 0
        %339 = vmatpush1.bf16.msra.mxu0 %v329
        %340 = vmatprep.subr.bf16.mxu0 0
        %341 = vmatpush1.bf16.msra.mxu0 0
        %342 = vmatprep.subr.bf16.mxu0 0
        %343 = vmatpush1.bf16.msra.mxu0 0
        %344 = vmatprep.subr.bf16.mxu0 0
        %345 = vmatpush1.bf16.msra.mxu0 0
        %346 = vmatprep.subr.bf16.mxu0 0
        %347 = vmatpush1.bf16.msra.mxu0 0
        %348 = vmatprep.subr.bf16.mxu0 0
        %349 = vmatpush1.bf16.msra.mxu0 0
        %350 = vmatprep.subr.bf16.mxu0 0
        %351 = vmatpush1.bf16.msra.mxu0 0
        %352 = vmatprep.subr.bf16.mxu0 0
        %353 = vmatpush1.bf16.msra.mxu0 0
        %354 = vmatprep.subr.bf16.mxu0 0
        %355 = vmatpush1.bf16.msra.mxu0 0
        %356 = vmatprep.subr.bf16.mxu0 0
        %357 = vmatpush1.bf16.msra.mxu0 0
        %358 = vmatprep.subr.bf16.mxu0 0
        %359 = vmatpush1.bf16.msra.mxu0 0
        %360 = vmatprep.subr.bf16.mxu0 0
        %361 = vmatpush1.bf16.msra.mxu0 0
        %362 = vmatprep.subr.bf16.mxu0 0
        %363 = vmatpush1.bf16.msra.mxu0 0
        %364 = vmatprep.subr.bf16.mxu0 0
        %365 = vmatpush1.bf16.msra.mxu0 0
        %366 = vmatprep.subr.bf16.mxu0 0
        %367 = vmatpush1.bf16.msra.mxu0 0
        %368 = vmatprep.subr.bf16.mxu0 0
        %369 = vmatpush1.bf16.msra.mxu0 0
        %370 = vmatprep.mubr.bf16.mxu0 0
        %371 = vmatmul.mubr.bf16.gmra.mrb[0].mxu0 %v333
        %v372 = vpop.f32.mrb[0].mxu0
        %v373 = vadd.f32 %v313, %v372
        %v374 = vpop.f32.mrb[0].mxu0
        %v375 = vpop.f32.mrb[0].mxu0
        %v376 = vadd.f32 %v313, %v375
        %v377 = vpop.f32.mrb[0].mxu0
        %378 = vmatprep.mubr.bf16.mxu0 0
        %379 = vmatmul.mubr.bf16.gmra.mrb[0].mxu0 %v336
        %v380 = vpop.f32.mrb[0].mxu0
        %v381 = vadd.f32 %v313, %v380
        %v382 = vpop.f32.mrb[0].mxu0
        %v383 = vpop.f32.mrb[0].mxu0
        %v384 = vadd.f32 %v313, %v383
        %v385 = vpop.f32.mrb[0].mxu0
        %386 = vdwg.mxu0
        %v387 = vmax.f32 %v373, 0.0
        %v388 = vmax.f32 %v376, 0.0
        %v389 = vmax.f32 %v381, 0.0
        %v390 = vmax.f32 %v384, 0.0
        %v391 = vld [vmem:[#allocation2] sm:$0xff]
        %v392 = vld [vmem:[#allocation2 + $0x8] sm:$0xff]
        %v393 = vld [vmem:[#allocation2 + $0x10] sm:$0xff]
        %v394 = vld [vmem:[#allocation2 + $0x18] sm:$0xff]
        %v395 = vpack.c.bf16 %v388, %v387
        %v396 = vpack.c.bf16 %v390, %v389
        %v397 = vld [vmem:[#allocation3] sm:$0xf]
        %v398 = vld [vmem:[#allocation3 + $0x4] sm:$0xf]
        %v399 = vld [vmem:[#allocation3 + $0x8] sm:$0xf]
        %v400 = vld [vmem:[#allocation3 + $0xc] sm:$0xf]
        %v401 = vld [vmem:[#allocation3 + $0x10] sm:$0xf]
        %v402 = vld [vmem:[#allocation3 + $0x14] sm:$0xf]
        %v403 = vld [vmem:[#allocation3 + $0x18] sm:$0xf]
        %v404 = vld [vmem:[#allocation3 + $0x1c] sm:$0xf]
        %v405 = vld [vmem:[#allocation3 + $0x20] sm:$0xf]
        %v406 = vld [vmem:[#allocation3 + $0x24] sm:$0xf]
        %v407 = vld [vmem:[#allocation3 + $0x28] sm:$0xf]
        %v408 = vld [vmem:[#allocation3 + $0x2c] sm:$0xf]
        %v409 = vld [vmem:[#allocation3 + $0x30] sm:$0xf]
        %v410 = vld [vmem:[#allocation3 + $0x34] sm:$0xf]
        %v411 = vld [vmem:[#allocation3 + $0x38] sm:$0xf]
        %v412 = vld [vmem:[#allocation3 + $0x3c] sm:$0xf]
        %v429 = vunpack.c.l.b16 %v397
        %v430 = vunpack.c.l.b16 %v398
        %v431 = vunpack.c.l.b16 %v399
        %v432 = vunpack.c.l.b16 %v400
        %v433 = vunpack.c.l.b16 %v401
        %v434 = vunpack.c.l.b16 %v402
        %v435 = vunpack.c.l.b16 %v403
        %v436 = vunpack.c.l.b16 %v404
        %v437 = vunpack.c.l.b16 %v405
        %v438 = vunpack.c.l.b16 %v406
        %v439 = vunpack.c.l.b16 %v407
        %v440 = vunpack.c.l.b16 %v408
        %v441 = vunpack.c.l.b16 %v409
        %v442 = vunpack.c.l.b16 %v410
        %v443 = vunpack.c.l.b16 %v411
        %v444 = vunpack.c.l.b16 %v412
        %v445 = vpack.c.b16 %v430, %v429
        %v446 = vpack.c.b16 %v432, %v431
        %v447 = vpack.c.b16 %v434, %v433
        %v448 = vpack.c.b16 %v436, %v435
        %v449 = vpack.c.b16 %v438, %v437
        %v450 = vpack.c.b16 %v440, %v439
        %v451 = vpack.c.b16 %v442, %v441
        %v452 = vpack.c.b16 %v444, %v443
        %461 = vmatprep.subr.bf16.mxu0 0
        %462 = vmatpush1.bf16.msra.mxu0 %v445
        %463 = vmatprep.subr.bf16.mxu0 0
        %464 = vmatpush1.bf16.msra.mxu0 %v446
        %465 = vmatprep.subr.bf16.mxu0 0
        %466 = vmatpush1.bf16.msra.mxu0 %v447
        %467 = vmatprep.subr.bf16.mxu0 0
        %468 = vmatpush1.bf16.msra.mxu0 %v448
        %469 = vmatprep.subr.bf16.mxu0 0
        %470 = vmatpush1.bf16.msra.mxu0 %v449
        %471 = vmatprep.subr.bf16.mxu0 0
        %472 = vmatpush1.bf16.msra.mxu0 %v450
        %473 = vmatprep.subr.bf16.mxu0 0
        %474 = vmatpush1.bf16.msra.mxu0 %v451
        %475 = vmatprep.subr.bf16.mxu0 0
        %476 = vmatpush1.bf16.msra.mxu0 %v452
        %477 = vmatprep.subr.bf16.mxu0 0
        %478 = vmatpush1.bf16.msra.mxu0 0
        %479 = vmatprep.subr.bf16.mxu0 0
        %480 = vmatpush1.bf16.msra.mxu0 0
        %481 = vmatprep.subr.bf16.mxu0 0
        %482 = vmatpush1.bf16.msra.mxu0 0
        %483 = vmatprep.subr.bf16.mxu0 0
        %484 = vmatpush1.bf16.msra.mxu0 0
        %485 = vmatprep.subr.bf16.mxu0 0
        %486 = vmatpush1.bf16.msra.mxu0 0
        %487 = vmatprep.subr.bf16.mxu0 0
        %488 = vmatpush1.bf16.msra.mxu0 0
        %489 = vmatprep.subr.bf16.mxu0 0
        %490 = vmatpush1.bf16.msra.mxu0 0
        %491 = vmatprep.subr.bf16.mxu0 0
        %492 = vmatpush1.bf16.msra.mxu0 0
        %493 = vmatprep.mubr.bf16.mxu0 0
        %494 = vmatmul.mubr.bf16.gmra.mrb[0].mxu0 %v395
        %v495 = vpop.f32.mrb[0].mxu0
        %v496 = vadd.f32 0.0, %v495
        %v497 = vpop.f32.mrb[0].mxu0
        %v498 = vpop.f32.mrb[0].mxu0
        %v499 = vadd.f32 0.0, %v498
        %v500 = vpop.f32.mrb[0].mxu0
        %501 = vmatprep.mubr.bf16.mxu0 0
        %502 = vmatmul.mubr.bf16.gmra.mrb[0].mxu0 %v396
        %v503 = vpop.f32.mrb[0].mxu0
        %v504 = vadd.f32 0.0, %v503
        %v505 = vpop.f32.mrb[0].mxu0
        %v506 = vpop.f32.mrb[0].mxu0
        %v507 = vadd.f32 0.0, %v506
        %v508 = vpop.f32.mrb[0].mxu0
        %509 = vdwg.mxu0
        %v510 = vadd.f32 %v391, %v496
        %v511 = vadd.f32 %v392, %v499
        %v512 = vadd.f32 %v393, %v504
        %v513 = vadd.f32 %v394, %v507
        %514 = vst [vmem:[#allocation2] sm:$0xff] %v510
        %515 = vst [vmem:[#allocation2 + $0x8] sm:$0xff] %v511
        %516 = vst [vmem:[#allocation2 + $0x10] sm:$0xff] %v512
        %517 = vst [vmem:[#allocation2 + $0x18] sm:$0xff] %v513
        // Predicated region
        $region49: #{tpu_custom_call.1} parent=39 // pred_check
          %p518 = pneg %p294
        $region50: #{tpu_custom_call.1} parent=39 // pred_check_branch
          %520 = sbr.rel (%p518) target = $region52
        $region51: #{tpu_custom_call.1} parent=39 // pred_region
          %v521 = vld [vmem:[#allocation2] sm:$0xff]
          %v522 = vld [vmem:[#allocation2 + $0x8] sm:$0xff]
          %v523 = vld [vmem:[#allocation2 + $0x10] sm:$0xff]
          %v524 = vld [vmem:[#allocation2 + $0x18] sm:$0xff]
          %v525 = vld [vmem:[%s4] sm:$0x1]
          %v527 = vlaneseq
          %v528 = vshrl.u32 %v527, 7
          %v529 = vsub.s32 0, %v528
          %v530 = vrot.slane %v525, %v529
          %v532 = vadd.f32 %v521, %v530
          %v533 = vadd.f32 %v522, %v530
          %v534 = vadd.f32 %v523, %v530
          %v535 = vadd.f32 %v524, %v530
          %536 = vst [vmem:[%s277] sm:$0xff] %v532
          %537 = vst [vmem:[%s277 + $0x8] sm:$0xff] %v533
          %538 = vst [vmem:[%s277 + $0x10] sm:$0xff] %v534
          %539 = vst [vmem:[%s277 + $0x18] sm:$0xff] %v535
        $region52: #{tpu_custom_call.1} parent=39 // pred_fallthru
          _
        %s540 = sand.u32 %s165, 1
        %s541 = scalar_lea.sflag [#allocation5], %s540
        %s542 = sand.u32 %s165, 1
        %s543 = smul.addr %s542, 32
        %s544 = scalar_lea.vmem [#allocation6], %s543
        // Predicated region
        $region53: #{tpu_custom_call.1} parent=39 // pred_check
          %p545 = pneg %p175
        $region54: #{tpu_custom_call.1} parent=39 // pred_check_branch
          %547 = sbr.rel (%p545) target = $region56
        $region55: #{tpu_custom_call.1} parent=39 // pred_region
          %s548 = smul.u32 4, %s24
          %s550 = ssub.s32 512, 512
          %551 = vsyncadd %s541, %s550
          %s552 = smul.addr %s548, 128
          %s553 = scalar_lea.hbm %s5, %s552
          %s554 = sshll.u32 %s544, 4
          %s555 = int_to_ptr.vmem [resolvable:$true] %s554
          %560 = dma.vmem_to_hbm [thread:$0]  %s555, 512, %s553, %s541, 128, 128, 8
        $region56: #{tpu_custom_call.1} parent=39 // pred_fallthru
          _
      $region40: #{tpu_custom_call.1} parent=5 // pred_fallthru
        _
      %p561 = scmp.le.s32.totalorder 2, %s15
      // Predicated region
      $region57: #{tpu_custom_call.1} parent=5 // pred_check
        %p562 = pneg %p561
      $region58: #{tpu_custom_call.1} parent=5 // pred_check_branch
        %564 = sbr.rel (%p562) target = $region60
      $region59: #{tpu_custom_call.1} parent=5 // pred_region
        %s565 = ssub.s32 %s15, 2
        // Predicated region
        $region61: #{tpu_custom_call.1} parent=59 // pred_check
          %p566 = pneg %p181
        $region62: #{tpu_custom_call.1} parent=59 // pred_check_branch
          %568 = sbr.rel (%p566) target = $region64
        $region63: #{tpu_custom_call.1} parent=59 // pred_region
          %s569 = sand.u32 %s166, 1
          %s570 = scalar_lea.sflag [#allocation5], %s569
          %s571 = sand.u32 %s166, 1
          %s572 = smul.addr %s571, 32
          %s573 = scalar_lea.vmem [#allocation6], %s572
          %574 = dma.done %s570, 512
        $region64: #{tpu_custom_call.1} parent=59 // pred_fallthru
          _
      $region60: #{tpu_custom_call.1} parent=5 // pred_fallthru
        _
    $region6: #{tpu_custom_call.1} parent=1 // loop_footer
      %s19 = sadd.s32 1, %s15
    $region7: #{tpu_custom_call.1} parent=1 // loop_footer_branch
      %14 = sbr.rel target = $region3
    $region8: #{tpu_custom_call.1} parent=1 // loop_exit
      _
    %575 = vsyncpa [#allocation4], 1
    %s576 = scalar_lea.sflag [#allocation4], 1
    %577 = vsyncpa %s576, 1
    %578 = vsyncpa [#allocation5], 1
    %s579 = scalar_lea.sflag [#allocation5], 1
    %580 = vsyncpa %s579, 1

</llo_original>
